<compile_context>
chip_gen: v7x
topology: tpu7x:2x2x1
jax: 0.10.0
libtpu: 0.0.40
codegen_flags: <defaults>
</compile_context>

<pallas_src>
import jax
import jax.numpy as jnp
from jax.experimental import pallas as pl
from jax.experimental.pallas import tpu as pltpu


def _round_up(a, b):
    return ((a + b - 1) // b) * b


def _dense_vpu(aT, w, b, *, relu):
    """y^T = act(W @ a^T + b) via unrolled VPU MACs (no MXU).

    aT: (K, BM) activations, batch on lanes.
    w : (N, K) weight (PyTorch layout), b: (N, 1) bias.
    Returns (N, BM) float32.
    """
    k_dim = aT.shape[0]
    # (N,1) * (1,BM) outer products; lane/sublane broadcasts are cheap (XLU).
    acc = b + w[:, 0:1] * aT[0:1, :]
    for k in range(1, k_dim):
        acc = acc + w[:, k:k + 1] * aT[k:k + 1, :]
    if relu:
        acc = jnp.maximum(acc, 0.0)
    return acc


def mlp_kernel(xT_ref, w1_ref, b1_ref, w2_ref, b2_ref, w3_ref, b3_ref, o_ref):
    xT = xT_ref[...].astype(jnp.float32)                          # (in, BM)
    h1 = _dense_vpu(xT, w1_ref[...], b1_ref[...], relu=True)      # (h1, BM)
    h2 = _dense_vpu(h1, w2_ref[...], b2_ref[...], relu=True)      # (h2, BM)
    out = _dense_vpu(h2, w3_ref[...], b3_ref[...], relu=False)    # (out, BM)
    o_ref[...] = out.astype(o_ref.dtype)


def mlp_forward(x, params, *, block_b=512):
    """x: (batch, in_features) f32 -> (batch, out_features) f32."""
    w1, b1, w2, b2, w3, b3 = params
    batch, in_features = x.shape
    out_features = w3.shape[0]

    # Lane-aligned batch tile, capped by the (padded) batch.  512 keeps vreg
    # pressure comfortable; raise toward 2048 for very large batches.
    # (Deeper pipelining via pipeline_mode=pl.Buffered(3) is an option on v7x.)
    bm = _round_up(max(128, min(block_b, _round_up(batch, 128))), 128)
    padded = _round_up(batch, bm)
    num_blocks = padded // bm

    # Layout plumbing: put batch on the lane axis and pad to whole tiles.
    xT = x.T                                             # (in_features, batch)
    if padded != batch:
        xT = jnp.pad(xT, ((0, 0), (0, padded - batch)))

    full = lambda a: pl.BlockSpec(a.shape, lambda i: (0,) * a.ndim)

    outT = pl.pallas_call(
        mlp_kernel,
        out_shape=jax.ShapeDtypeStruct((out_features, padded), jnp.float32),
        grid=(num_blocks,),
        in_specs=[
            pl.BlockSpec((in_features, bm), lambda i: (0, i)),   # streamed x
            full(w1), full(b1), full(w2), full(b2), full(w3), full(b3),
        ],
        out_specs=pl.BlockSpec((out_features, bm), lambda i: (0, i)),
        compiler_params=pltpu.CompilerParams(
            dimension_semantics=("parallel",),
        ),
    )(xT, w1, b1, w2, b2, w3, b3)

    return outT[:, :batch].T                             # back to (batch, out)


def init_params(key, in_features=4, h1=8, h2=9, out_features=3):
    """PyTorch nn.Linear-style init: U(-1/sqrt(fan_in), 1/sqrt(fan_in))."""
    ks = jax.random.split(key, 6)

    def linear(kw, kb, fan_in, fan_out):
        bound = 1.0 / float(fan_in) ** 0.5
        w = jax.random.uniform(kw, (fan_out, fan_in), jnp.float32, -bound, bound)
        b = jax.random.uniform(kb, (fan_out, 1), jnp.float32, -bound, bound)
        return w, b

    w1, b1 = linear(ks[0], ks[1], in_features, h1)
    w2, b2 = linear(ks[2], ks[3], h1, h2)
    w3, b3 = linear(ks[4], ks[5], h2, out_features)
    return (w1, b1, w2, b2, w3, b3)


def reference_forward(x, params):
    w1, b1, w2, b2, w3, b3 = params
    h = jax.nn.relu(x @ w1.T + b1.T)
    h = jax.nn.relu(h @ w2.T + b2.T)
    return h @ w3.T + b3.T


if __name__ == "__main__":
    key = jax.random.PRNGKey(0)
    k_p, k_x1, k_x2 = jax.random.split(key, 3)
    params = init_params(k_p, in_features=4, h1=8, h2=9, out_features=3)

    # Tiny batch matching the PyTorch module's typical use (single tile).
    x_small = jax.random.normal(k_x1, (8, 4), dtype=jnp.float32)
    out_small = jax.block_until_ready(mlp_forward(x_small, params))
    ref_small = reference_forward(x_small, params)
    assert out_small.shape == (8, 3), out_small.shape
    assert jnp.allclose(out_small, ref_small, atol=1e-5, rtol=1e-5), "mismatch (small)"

    # Batch that exercises multiple grid steps plus a padded tail.
    x_big = jax.random.normal(k_x2, (300, 4), dtype=jnp.float32)
    out_big = jax.block_until_ready(mlp_forward(x_big, params, block_b=128))
    ref_big = reference_forward(x_big, params)
    assert out_big.shape == (300, 3), out_big.shape
    assert jnp.allclose(out_big, ref_big, atol=1e-5, rtol=1e-5), "mismatch (big)"

    print("KERNEL_OK")
</pallas_src>

<mosaic_0001>
module attributes {stable_mosaic.version = 11 : i64} {
  func.func @mlp_kernel(%arg0: i32, %arg1: memref<4x128xf32, #tpu.memory_space<vmem>>, %arg2: memref<8x4xf32, #tpu.memory_space<vmem>>, %arg3: memref<8x1xf32, #tpu.memory_space<vmem>>, %arg4: memref<9x8xf32, #tpu.memory_space<vmem>>, %arg5: memref<9x1xf32, #tpu.memory_space<vmem>>, %arg6: memref<3x9xf32, #tpu.memory_space<vmem>>, %arg7: memref<3x1xf32, #tpu.memory_space<vmem>>, %arg8: memref<3x128xf32, #tpu.memory_space<vmem>>) attributes {dimension_semantics = [#tpu.dimension_semantics<parallel>], iteration_bounds = array<i64: 1>, scalar_prefetch = 0 : i64, scratch_operands = 0 : i64, tpu.core_type = #tpu.core_type<tc>, window_params = [{transform_indices = @transform_0, window_bounds = array<i64: 4, 128>}, {pipeline_mode = #tpu.pipeline_mode<synchronous>, transform_indices = @transform_1, window_bounds = array<i64: 8, 4>}, {pipeline_mode = #tpu.pipeline_mode<synchronous>, transform_indices = @transform_2, window_bounds = array<i64: 8, 1>}, {pipeline_mode = #tpu.pipeline_mode<synchronous>, transform_indices = @transform_3, window_bounds = array<i64: 9, 8>}, {pipeline_mode = #tpu.pipeline_mode<synchronous>, transform_indices = @transform_4, window_bounds = array<i64: 9, 1>}, {pipeline_mode = #tpu.pipeline_mode<synchronous>, transform_indices = @transform_5, window_bounds = array<i64: 3, 9>}, {pipeline_mode = #tpu.pipeline_mode<synchronous>, transform_indices = @transform_6, window_bounds = array<i64: 3, 1>}, {transform_indices = @transform_7, window_bounds = array<i64: 3, 128>}]} {
    %c0 = arith.constant 0 : index
    %c0_0 = arith.constant 0 : index
    %0 = vector.load %arg1[%c0, %c0_0] : memref<4x128xf32, #tpu.memory_space<vmem>>, vector<4x128xf32>
    %c0_1 = arith.constant 0 : index
    %c0_2 = arith.constant 0 : index
    %1 = vector.load %arg2[%c0_1, %c0_2] : memref<8x4xf32, #tpu.memory_space<vmem>>, vector<8x4xf32>
    %c0_3 = arith.constant 0 : index
    %c0_4 = arith.constant 0 : index
    %2 = vector.load %arg3[%c0_3, %c0_4] : memref<8x1xf32, #tpu.memory_space<vmem>>, vector<8x1xf32>
    %3 = vector.extract_strided_slice %1 {offsets = [0, 0], sizes = [8, 1], strides = [1, 1]} : vector<8x4xf32> to vector<8x1xf32>
    %4 = vector.extract_strided_slice %0 {offsets = [0, 0], sizes = [1, 128], strides = [1, 1]} : vector<4x128xf32> to vector<1x128xf32>
    %5 = vector.broadcast %3 : vector<8x1xf32> to vector<8x128xf32>
    %6 = vector.broadcast %4 : vector<1x128xf32> to vector<8x128xf32>
    %7 = arith.mulf %5, %6 : vector<8x128xf32>
    %8 = vector.broadcast %2 : vector<8x1xf32> to vector<8x128xf32>
    %9 = arith.addf %8, %7 : vector<8x128xf32>
    %10 = vector.extract_strided_slice %1 {offsets = [0, 1], sizes = [8, 1], strides = [1, 1]} : vector<8x4xf32> to vector<8x1xf32>
    %11 = vector.extract_strided_slice %0 {offsets = [1, 0], sizes = [1, 128], strides = [1, 1]} : vector<4x128xf32> to vector<1x128xf32>
    %12 = vector.broadcast %10 : vector<8x1xf32> to vector<8x128xf32>
    %13 = vector.broadcast %11 : vector<1x128xf32> to vector<8x128xf32>
    %14 = arith.mulf %12, %13 : vector<8x128xf32>
    %15 = arith.addf %9, %14 : vector<8x128xf32>
    %16 = vector.extract_strided_slice %1 {offsets = [0, 2], sizes = [8, 1], strides = [1, 1]} : vector<8x4xf32> to vector<8x1xf32>
    %17 = vector.extract_strided_slice %0 {offsets = [2, 0], sizes = [1, 128], strides = [1, 1]} : vector<4x128xf32> to vector<1x128xf32>
    %18 = vector.broadcast %16 : vector<8x1xf32> to vector<8x128xf32>
    %19 = vector.broadcast %17 : vector<1x128xf32> to vector<8x128xf32>
    %20 = arith.mulf %18, %19 : vector<8x128xf32>
    %21 = arith.addf %15, %20 : vector<8x128xf32>
    %22 = vector.extract_strided_slice %1 {offsets = [0, 3], sizes = [8, 1], strides = [1, 1]} : vector<8x4xf32> to vector<8x1xf32>
    %23 = vector.extract_strided_slice %0 {offsets = [3, 0], sizes = [1, 128], strides = [1, 1]} : vector<4x128xf32> to vector<1x128xf32>
    %24 = vector.broadcast %22 : vector<8x1xf32> to vector<8x128xf32>
    %25 = vector.broadcast %23 : vector<1x128xf32> to vector<8x128xf32>
    %26 = arith.mulf %24, %25 : vector<8x128xf32>
    %27 = arith.addf %21, %26 : vector<8x128xf32>
    %cst = arith.constant 0.000000e+00 : f32
    %28 = vector.broadcast %cst : f32 to vector<8x128xf32>
    %29 = arith.maximumf %27, %28 : vector<8x128xf32>
    %c0_5 = arith.constant 0 : index
    %c0_6 = arith.constant 0 : index
    %30 = vector.load %arg4[%c0_5, %c0_6] : memref<9x8xf32, #tpu.memory_space<vmem>>, vector<9x8xf32>
    %c0_7 = arith.constant 0 : index
    %c0_8 = arith.constant 0 : index
    %31 = vector.load %arg5[%c0_7, %c0_8] : memref<9x1xf32, #tpu.memory_space<vmem>>, vector<9x1xf32>
    %32 = vector.extract_strided_slice %30 {offsets = [0, 0], sizes = [9, 1], strides = [1, 1]} : vector<9x8xf32> to vector<9x1xf32>
    %33 = vector.extract_strided_slice %29 {offsets = [0, 0], sizes = [1, 128], strides = [1, 1]} : vector<8x128xf32> to vector<1x128xf32>
    %34 = vector.broadcast %32 : vector<9x1xf32> to vector<9x128xf32>
    %35 = vector.broadcast %33 : vector<1x128xf32> to vector<9x128xf32>
    %36 = arith.mulf %34, %35 : vector<9x128xf32>
    %37 = vector.broadcast %31 : vector<9x1xf32> to vector<9x128xf32>
    %38 = arith.addf %37, %36 : vector<9x128xf32>
    %39 = vector.extract_strided_slice %30 {offsets = [0, 1], sizes = [9, 1], strides = [1, 1]} : vector<9x8xf32> to vector<9x1xf32>
    %40 = vector.extract_strided_slice %29 {offsets = [1, 0], sizes = [1, 128], strides = [1, 1]} : vector<8x128xf32> to vector<1x128xf32>
    %41 = vector.broadcast %39 : vector<9x1xf32> to vector<9x128xf32>
    %42 = vector.broadcast %40 : vector<1x128xf32> to vector<9x128xf32>
    %43 = arith.mulf %41, %42 : vector<9x128xf32>
    %44 = arith.addf %38, %43 : vector<9x128xf32>
    %45 = vector.extract_strided_slice %30 {offsets = [0, 2], sizes = [9, 1], strides = [1, 1]} : vector<9x8xf32> to vector<9x1xf32>
    %46 = vector.extract_strided_slice %29 {offsets = [2, 0], sizes = [1, 128], strides = [1, 1]} : vector<8x128xf32> to vector<1x128xf32>
    %47 = vector.broadcast %45 : vector<9x1xf32> to vector<9x128xf32>
    %48 = vector.broadcast %46 : vector<1x128xf32> to vector<9x128xf32>
    %49 = arith.mulf %47, %48 : vector<9x128xf32>
    %50 = arith.addf %44, %49 : vector<9x128xf32>
    %51 = vector.extract_strided_slice %30 {offsets = [0, 3], sizes = [9, 1], strides = [1, 1]} : vector<9x8xf32> to vector<9x1xf32>
    %52 = vector.extract_strided_slice %29 {offsets = [3, 0], sizes = [1, 128], strides = [1, 1]} : vector<8x128xf32> to vector<1x128xf32>
    %53 = vector.broadcast %51 : vector<9x1xf32> to vector<9x128xf32>
    %54 = vector.broadcast %52 : vector<1x128xf32> to vector<9x128xf32>
    %55 = arith.mulf %53, %54 : vector<9x128xf32>
    %56 = arith.addf %50, %55 : vector<9x128xf32>
    %57 = vector.extract_strided_slice %30 {offsets = [0, 4], sizes = [9, 1], strides = [1, 1]} : vector<9x8xf32> to vector<9x1xf32>
    %58 = vector.extract_strided_slice %29 {offsets = [4, 0], sizes = [1, 128], strides = [1, 1]} : vector<8x128xf32> to vector<1x128xf32>
    %59 = vector.broadcast %57 : vector<9x1xf32> to vector<9x128xf32>
    %60 = vector.broadcast %58 : vector<1x128xf32> to vector<9x128xf32>
    %61 = arith.mulf %59, %60 : vector<9x128xf32>
    %62 = arith.addf %56, %61 : vector<9x128xf32>
    %63 = vector.extract_strided_slice %30 {offsets = [0, 5], sizes = [9, 1], strides = [1, 1]} : vector<9x8xf32> to vector<9x1xf32>
    %64 = vector.extract_strided_slice %29 {offsets = [5, 0], sizes = [1, 128], strides = [1, 1]} : vector<8x128xf32> to vector<1x128xf32>
    %65 = vector.broadcast %63 : vector<9x1xf32> to vector<9x128xf32>
    %66 = vector.broadcast %64 : vector<1x128xf32> to vector<9x128xf32>
    %67 = arith.mulf %65, %66 : vector<9x128xf32>
    %68 = arith.addf %62, %67 : vector<9x128xf32>
    %69 = vector.extract_strided_slice %30 {offsets = [0, 6], sizes = [9, 1], strides = [1, 1]} : vector<9x8xf32> to vector<9x1xf32>
    %70 = vector.extract_strided_slice %29 {offsets = [6, 0], sizes = [1, 128], strides = [1, 1]} : vector<8x128xf32> to vector<1x128xf32>
    %71 = vector.broadcast %69 : vector<9x1xf32> to vector<9x128xf32>
    %72 = vector.broadcast %70 : vector<1x128xf32> to vector<9x128xf32>
    %73 = arith.mulf %71, %72 : vector<9x128xf32>
    %74 = arith.addf %68, %73 : vector<9x128xf32>
    %75 = vector.extract_strided_slice %30 {offsets = [0, 7], sizes = [9, 1], strides = [1, 1]} : vector<9x8xf32> to vector<9x1xf32>
    %76 = vector.extract_strided_slice %29 {offsets = [7, 0], sizes = [1, 128], strides = [1, 1]} : vector<8x128xf32> to vector<1x128xf32>
    %77 = vector.broadcast %75 : vector<9x1xf32> to vector<9x128xf32>
    %78 = vector.broadcast %76 : vector<1x128xf32> to vector<9x128xf32>
    %79 = arith.mulf %77, %78 : vector<9x128xf32>
    %80 = arith.addf %74, %79 : vector<9x128xf32>
    %cst_9 = arith.constant 0.000000e+00 : f32
    %81 = vector.broadcast %cst_9 : f32 to vector<9x128xf32>
    %82 = arith.maximumf %80, %81 : vector<9x128xf32>
    %c0_10 = arith.constant 0 : index
    %c0_11 = arith.constant 0 : index
    %83 = vector.load %arg6[%c0_10, %c0_11] : memref<3x9xf32, #tpu.memory_space<vmem>>, vector<3x9xf32>
    %c0_12 = arith.constant 0 : index
    %c0_13 = arith.constant 0 : index
    %84 = vector.load %arg7[%c0_12, %c0_13] : memref<3x1xf32, #tpu.memory_space<vmem>>, vector<3x1xf32>
    %85 = vector.extract_strided_slice %83 {offsets = [0, 0], sizes = [3, 1], strides = [1, 1]} : vector<3x9xf32> to vector<3x1xf32>
    %86 = vector.extract_strided_slice %82 {offsets = [0, 0], sizes = [1, 128], strides = [1, 1]} : vector<9x128xf32> to vector<1x128xf32>
    %87 = vector.broadcast %85 : vector<3x1xf32> to vector<3x128xf32>
    %88 = vector.broadcast %86 : vector<1x128xf32> to vector<3x128xf32>
    %89 = arith.mulf %87, %88 : vector<3x128xf32>
    %90 = vector.broadcast %84 : vector<3x1xf32> to vector<3x128xf32>
    %91 = arith.addf %90, %89 : vector<3x128xf32>
    %92 = vector.extract_strided_slice %83 {offsets = [0, 1], sizes = [3, 1], strides = [1, 1]} : vector<3x9xf32> to vector<3x1xf32>
    %93 = vector.extract_strided_slice %82 {offsets = [1, 0], sizes = [1, 128], strides = [1, 1]} : vector<9x128xf32> to vector<1x128xf32>
    %94 = vector.broadcast %92 : vector<3x1xf32> to vector<3x128xf32>
    %95 = vector.broadcast %93 : vector<1x128xf32> to vector<3x128xf32>
    %96 = arith.mulf %94, %95 : vector<3x128xf32>
    %97 = arith.addf %91, %96 : vector<3x128xf32>
    %98 = vector.extract_strided_slice %83 {offsets = [0, 2], sizes = [3, 1], strides = [1, 1]} : vector<3x9xf32> to vector<3x1xf32>
    %99 = vector.extract_strided_slice %82 {offsets = [2, 0], sizes = [1, 128], strides = [1, 1]} : vector<9x128xf32> to vector<1x128xf32>
    %100 = vector.broadcast %98 : vector<3x1xf32> to vector<3x128xf32>
    %101 = vector.broadcast %99 : vector<1x128xf32> to vector<3x128xf32>
    %102 = arith.mulf %100, %101 : vector<3x128xf32>
    %103 = arith.addf %97, %102 : vector<3x128xf32>
    %104 = vector.extract_strided_slice %83 {offsets = [0, 3], sizes = [3, 1], strides = [1, 1]} : vector<3x9xf32> to vector<3x1xf32>
    %105 = vector.extract_strided_slice %82 {offsets = [3, 0], sizes = [1, 128], strides = [1, 1]} : vector<9x128xf32> to vector<1x128xf32>
    %106 = vector.broadcast %104 : vector<3x1xf32> to vector<3x128xf32>
    %107 = vector.broadcast %105 : vector<1x128xf32> to vector<3x128xf32>
    %108 = arith.mulf %106, %107 : vector<3x128xf32>
    %109 = arith.addf %103, %108 : vector<3x128xf32>
    %110 = vector.extract_strided_slice %83 {offsets = [0, 4], sizes = [3, 1], strides = [1, 1]} : vector<3x9xf32> to vector<3x1xf32>
    %111 = vector.extract_strided_slice %82 {offsets = [4, 0], sizes = [1, 128], strides = [1, 1]} : vector<9x128xf32> to vector<1x128xf32>
    %112 = vector.broadcast %110 : vector<3x1xf32> to vector<3x128xf32>
    %113 = vector.broadcast %111 : vector<1x128xf32> to vector<3x128xf32>
    %114 = arith.mulf %112, %113 : vector<3x128xf32>
    %115 = arith.addf %109, %114 : vector<3x128xf32>
    %116 = vector.extract_strided_slice %83 {offsets = [0, 5], sizes = [3, 1], strides = [1, 1]} : vector<3x9xf32> to vector<3x1xf32>
    %117 = vector.extract_strided_slice %82 {offsets = [5, 0], sizes = [1, 128], strides = [1, 1]} : vector<9x128xf32> to vector<1x128xf32>
    %118 = vector.broadcast %116 : vector<3x1xf32> to vector<3x128xf32>
    %119 = vector.broadcast %117 : vector<1x128xf32> to vector<3x128xf32>
    %120 = arith.mulf %118, %119 : vector<3x128xf32>
    %121 = arith.addf %115, %120 : vector<3x128xf32>
    %122 = vector.extract_strided_slice %83 {offsets = [0, 6], sizes = [3, 1], strides = [1, 1]} : vector<3x9xf32> to vector<3x1xf32>
    %123 = vector.extract_strided_slice %82 {offsets = [6, 0], sizes = [1, 128], strides = [1, 1]} : vector<9x128xf32> to vector<1x128xf32>
    %124 = vector.broadcast %122 : vector<3x1xf32> to vector<3x128xf32>
    %125 = vector.broadcast %123 : vector<1x128xf32> to vector<3x128xf32>
    %126 = arith.mulf %124, %125 : vector<3x128xf32>
    %127 = arith.addf %121, %126 : vector<3x128xf32>
    %128 = vector.extract_strided_slice %83 {offsets = [0, 7], sizes = [3, 1], strides = [1, 1]} : vector<3x9xf32> to vector<3x1xf32>
    %129 = vector.extract_strided_slice %82 {offsets = [7, 0], sizes = [1, 128], strides = [1, 1]} : vector<9x128xf32> to vector<1x128xf32>
    %130 = vector.broadcast %128 : vector<3x1xf32> to vector<3x128xf32>
    %131 = vector.broadcast %129 : vector<1x128xf32> to vector<3x128xf32>
    %132 = arith.mulf %130, %131 : vector<3x128xf32>
    %133 = arith.addf %127, %132 : vector<3x128xf32>
    %134 = vector.extract_strided_slice %83 {offsets = [0, 8], sizes = [3, 1], strides = [1, 1]} : vector<3x9xf32> to vector<3x1xf32>
    %135 = vector.extract_strided_slice %82 {offsets = [8, 0], sizes = [1, 128], strides = [1, 1]} : vector<9x128xf32> to vector<1x128xf32>
    %136 = vector.broadcast %134 : vector<3x1xf32> to vector<3x128xf32>
    %137 = vector.broadcast %135 : vector<1x128xf32> to vector<3x128xf32>
    %138 = arith.mulf %136, %137 : vector<3x128xf32>
    %139 = arith.addf %133, %138 : vector<3x128xf32>
    %c0_14 = arith.constant 0 : index
    %c0_15 = arith.constant 0 : index
    %140 = vector.load %arg8[%c0_14, %c0_15] : memref<3x128xf32, #tpu.memory_space<vmem>>, vector<3x128xf32>
    tpu.vector_store %arg8[%c0_14, %c0_15], %139 {strides = array<i32>} : memref<3x128xf32, #tpu.memory_space<vmem>>, vector<3x128xf32>,
    return
  }
  func.func @transform_0(%arg0: i32) -> (i32, i32) {
    %c0_i32 = arith.constant 0 : i32
    %c0_i32_0 = arith.constant 0 : i32
    return %c0_i32, %arg0 : i32, i32
  }
  func.func @transform_1(%arg0: i32) -> (i32, i32) {
    %c0_i32 = arith.constant 0 : i32
    %c0_i32_0 = arith.constant 0 : i32
    %c0_i32_1 = arith.constant 0 : i32
    return %c0_i32, %c0_i32_0 : i32, i32
  }
  func.func @transform_2(%arg0: i32) -> (i32, i32) {
    %c0_i32 = arith.constant 0 : i32
    %c0_i32_0 = arith.constant 0 : i32
    %c0_i32_1 = arith.constant 0 : i32
    return %c0_i32, %c0_i32_0 : i32, i32
  }
  func.func @transform_3(%arg0: i32) -> (i32, i32) {
    %c0_i32 = arith.constant 0 : i32
    %c0_i32_0 = arith.constant 0 : i32
    %c0_i32_1 = arith.constant 0 : i32
    return %c0_i32, %c0_i32_0 : i32, i32
  }
  func.func @transform_4(%arg0: i32) -> (i32, i32) {
    %c0_i32 = arith.constant 0 : i32
    %c0_i32_0 = arith.constant 0 : i32
    %c0_i32_1 = arith.constant 0 : i32
    return %c0_i32, %c0_i32_0 : i32, i32
  }
  func.func @transform_5(%arg0: i32) -> (i32, i32) {
    %c0_i32 = arith.constant 0 : i32
    %c0_i32_0 = arith.constant 0 : i32
    %c0_i32_1 = arith.constant 0 : i32
    return %c0_i32, %c0_i32_0 : i32, i32
  }
  func.func @transform_6(%arg0: i32) -> (i32, i32) {
    %c0_i32 = arith.constant 0 : i32
    %c0_i32_0 = arith.constant 0 : i32
    %c0_i32_1 = arith.constant 0 : i32
    return %c0_i32, %c0_i32_0 : i32, i32
  }
  func.func @transform_7(%arg0: i32) -> (i32, i32) {
    %c0_i32 = arith.constant 0 : i32
    %c0_i32_0 = arith.constant 0 : i32
    return %c0_i32, %arg0 : i32, i32
  }
}

</mosaic_0001>

<llo_original>
// kernel: tpu_custom_call.1
$region0: #{tpu_custom_call.1}
  #allocation0 [shape = 'u32[]', space=smem, size = 0x4, offset = 0x4, fixed_abs, tag = 'smem constant byte address 0x4 - core index']
  #allocation1 [shape = 'u32[144,128]{1,0:T(1,128)}', space=vmem, size = 0x12000, scoped, tag = 'internal scratch']
  %s0 = inlined_call_operand.vmem [shape: f32[4,128], index: 0, kind: input, shape index: {}]
  %s1 = inlined_call_operand.vmem [shape: f32[8,4], index: 1, kind: input, shape index: {}]
  %s2 = inlined_call_operand.vmem [shape: f32[8,1], index: 2, kind: input, shape index: {}]
  %s3 = inlined_call_operand.vmem [shape: f32[9,8], index: 3, kind: input, shape index: {}]
  %s4 = inlined_call_operand.vmem [shape: f32[9,1], index: 4, kind: input, shape index: {}]
  %s5 = inlined_call_operand.vmem [shape: f32[3,9], index: 5, kind: input, shape index: {}]
  %s6 = inlined_call_operand.vmem [shape: f32[3,1], index: 6, kind: input, shape index: {}]
  %s7 = inlined_call_operand.hbm [shape: f32[3,128], index: 7, kind: output, shape index: {}]
  %s8 = sld [smem:[#allocation0]]
  $region38: #{tpu_custom_call.1} parent=0
    _
  %s10 = ssub.s32 1, %s8
  %s11 = scalar_select 0, %s10, %s8
  $region1: #{tpu_custom_call.1} parent=0
    #allocation2 [shape = 'u8[2048]{0}', space=vmem, size = 0x800, scoped, tag = 'output window, operand 0, single buffered']
    #allocation3 [shape = 's32[1]{0}', space=sflag, size = 0x4, scoped, tag = 'scoped memory for tpu_custom_call.1']
    %12 = vsyncpa [#allocation3], 0
    // Predicated region
    $region2: #{tpu_custom_call.1} parent=1 // pred_check
      _
    $region3: #{tpu_custom_call.1} parent=1 // pred_check_branch
      %14 = sbr.rel (0) target = $region5
    $region4: #{tpu_custom_call.1} parent=1 // pred_region
      _
    $region5: #{tpu_custom_call.1} parent=1 // pred_fallthru
      _
    // Predicated region
    $region6: #{tpu_custom_call.1} parent=1 // pred_check
      _
    $region7: #{tpu_custom_call.1} parent=1 // pred_check_branch
      %16 = sbr.rel (0) target = $region9
    $region8: #{tpu_custom_call.1} parent=1 // pred_region
      _
    $region9: #{tpu_custom_call.1} parent=1 // pred_fallthru
      _
    // Predicated region
    $region10: #{tpu_custom_call.1} parent=1 // pred_check
      _
    $region11: #{tpu_custom_call.1} parent=1 // pred_check_branch
      %18 = sbr.rel (0) target = $region13
    $region12: #{tpu_custom_call.1} parent=1 // pred_region
      _
    $region13: #{tpu_custom_call.1} parent=1 // pred_fallthru
      _
    // Predicated region
    $region14: #{tpu_custom_call.1} parent=1 // pred_check
      _
    $region15: #{tpu_custom_call.1} parent=1 // pred_check_branch
      %20 = sbr.rel (0) target = $region17
    $region16: #{tpu_custom_call.1} parent=1 // pred_region
      _
    $region17: #{tpu_custom_call.1} parent=1 // pred_fallthru
      _
    // Predicated region
    $region18: #{tpu_custom_call.1} parent=1 // pred_check
      _
    $region19: #{tpu_custom_call.1} parent=1 // pred_check_branch
      %22 = sbr.rel (0) target = $region21
    $region20: #{tpu_custom_call.1} parent=1 // pred_region
      _
    $region21: #{tpu_custom_call.1} parent=1 // pred_fallthru
      _
    // Predicated region
    $region22: #{tpu_custom_call.1} parent=1 // pred_check
      _
    $region23: #{tpu_custom_call.1} parent=1 // pred_check_branch
      %24 = sbr.rel (0) target = $region25
    $region24: #{tpu_custom_call.1} parent=1 // pred_region
      _
    $region25: #{tpu_custom_call.1} parent=1 // pred_fallthru
      _
    // Predicated region
    $region26: #{tpu_custom_call.1} parent=1 // pred_check
      _
    $region27: #{tpu_custom_call.1} parent=1 // pred_check_branch
      %26 = sbr.rel (0) target = $region29
    $region28: #{tpu_custom_call.1} parent=1 // pred_region
      _
    $region29: #{tpu_custom_call.1} parent=1 // pred_fallthru
      _
    %v27 = vld [vmem:[%s0] sm:$0xf]
    %v28 = vld [vmem:[%s1] sm:$0xff]
    %v29 = vld [vmem:[%s2] sm:$0xff]
    %31 = vset.pattern.permute.xlu0 0
    %32 = vperm.xlu0 %31, %v28
    %v33 = vpop.permute.xlu0 %32
    %v35 = vlaneseq
    %v36 = vshrl.u32 %v35, 7
    %v37 = vsub.s32 0, %v36
    %v38 = vrot.slane %v27, %v37
    %v39 = vmul.f32 %v33, %v38
    %41 = vset.pattern.permute.xlu0 0
    %42 = vperm.xlu0 %41, %v29
    %v43 = vpop.permute.xlu0 %42
    %v45 = vadd.f32 %v43, %v39
    %46 = vset.pattern.permute.xlu0 1
    %47 = vperm.xlu0 %46, %v28
    %v48 = vpop.permute.xlu0 %47
    %v50 = vlaneseq
    %v51 = vshrl.u32 %v50, 7
    %v52 = vsub.s32 1, %v51
    %v53 = vrot.slane %v27, %v52
    %v54 = vmul.f32 %v48, %v53
    %v55 = vadd.f32 %v45, %v54
    %56 = vset.pattern.permute.xlu0 2
    %57 = vperm.xlu0 %56, %v28
    %v58 = vpop.permute.xlu0 %57
    %v60 = vlaneseq
    %v61 = vshrl.u32 %v60, 7
    %v62 = vsub.s32 2, %v61
    %v63 = vrot.slane %v27, %v62
    %v64 = vmul.f32 %v58, %v63
    %v65 = vadd.f32 %v55, %v64
    %66 = vset.pattern.permute.xlu0 3
    %67 = vperm.xlu0 %66, %v28
    %v68 = vpop.permute.xlu0 %67
    %v70 = vlaneseq
    %v71 = vshrl.u32 %v70, 7
    %v72 = vsub.s32 3, %v71
    %v73 = vrot.slane %v27, %v72
    %v74 = vmul.f32 %v68, %v73
    %v75 = vadd.f32 %v65, %v74
    %v76 = vmax.f32 %v75, 0.0
    %v77 = vld [vmem:[%s3] sm:$0xff]
    %v78 = vld [vmem:[%s3 + $0x8] sm:$0x1]
    %v79 = vld [vmem:[%s4] sm:$0xff]
    %v80 = vld [vmem:[%s4 + $0x8] sm:$0x1]
    %82 = vset.pattern.permute.xlu0 0
    %83 = vperm.xlu0 %82, %v77
    %v84 = vpop.permute.xlu0 %83
    %87 = vset.pattern.permute.xlu0 0
    %88 = vperm.xlu0 %87, %v78
    %v89 = vpop.permute.xlu0 %88
    %v91 = vlaneseq
    %v92 = vshrl.u32 %v91, 7
    %v93 = vsub.s32 0, %v92
    %v94 = vrot.slane %v76, %v93
    %v95 = vmul.f32 %v84, %v94
    %v96 = vmul.f32 %v89, %v94
    %98 = vset.pattern.permute.xlu0 0
    %99 = vperm.xlu0 %98, %v79
    %v100 = vpop.permute.xlu0 %99
    %103 = vset.pattern.permute.xlu0 0
    %104 = vperm.xlu0 %103, %v80
    %v105 = vpop.permute.xlu0 %104
    %v107 = vadd.f32 %v100, %v95
    %v108 = vadd.f32 %v105, %v96
    %109 = vset.pattern.permute.xlu0 1
    %110 = vperm.xlu0 %109, %v77
    %v111 = vpop.permute.xlu0 %110
    %113 = vset.pattern.permute.xlu0 1
    %114 = vperm.xlu0 %113, %v78
    %v115 = vpop.permute.xlu0 %114
    %v117 = vlaneseq
    %v118 = vshrl.u32 %v117, 7
    %v119 = vsub.s32 1, %v118
    %v120 = vrot.slane %v76, %v119
    %v121 = vmul.f32 %v111, %v120
    %v122 = vmul.f32 %v115, %v120
    %v123 = vadd.f32 %v107, %v121
    %v124 = vadd.f32 %v108, %v122
    %125 = vset.pattern.permute.xlu0 2
    %126 = vperm.xlu0 %125, %v77
    %v127 = vpop.permute.xlu0 %126
    %129 = vset.pattern.permute.xlu0 2
    %130 = vperm.xlu0 %129, %v78
    %v131 = vpop.permute.xlu0 %130
    %v133 = vlaneseq
    %v134 = vshrl.u32 %v133, 7
    %v135 = vsub.s32 2, %v134
    %v136 = vrot.slane %v76, %v135
    %v137 = vmul.f32 %v127, %v136
    %v138 = vmul.f32 %v131, %v136
    %v139 = vadd.f32 %v123, %v137
    %v140 = vadd.f32 %v124, %v138
    %141 = vset.pattern.permute.xlu0 3
    %142 = vperm.xlu0 %141, %v77
    %v143 = vpop.permute.xlu0 %142
    %145 = vset.pattern.permute.xlu0 3
    %146 = vperm.xlu0 %145, %v78
    %v147 = vpop.permute.xlu0 %146
    %v149 = vlaneseq
    %v150 = vshrl.u32 %v149, 7
    %v151 = vsub.s32 3, %v150
    %v152 = vrot.slane %v76, %v151
    %v153 = vmul.f32 %v143, %v152
    %v154 = vmul.f32 %v147, %v152
    %v155 = vadd.f32 %v139, %v153
    %v156 = vadd.f32 %v140, %v154
    %157 = vset.pattern.permute.xlu0 4
    %158 = vperm.xlu0 %157, %v77
    %v159 = vpop.permute.xlu0 %158
    %161 = vset.pattern.permute.xlu0 4
    %162 = vperm.xlu0 %161, %v78
    %v163 = vpop.permute.xlu0 %162
    %v165 = vlaneseq
    %v166 = vshrl.u32 %v165, 7
    %v167 = vsub.s32 4, %v166
    %v168 = vrot.slane %v76, %v167
    %v169 = vmul.f32 %v159, %v168
    %v170 = vmul.f32 %v163, %v168
    %v171 = vadd.f32 %v155, %v169
    %v172 = vadd.f32 %v156, %v170
    %173 = vset.pattern.permute.xlu0 5
    %174 = vperm.xlu0 %173, %v77
    %v175 = vpop.permute.xlu0 %174
    %177 = vset.pattern.permute.xlu0 5
    %178 = vperm.xlu0 %177, %v78
    %v179 = vpop.permute.xlu0 %178
    %v181 = vlaneseq
    %v182 = vshrl.u32 %v181, 7
    %v183 = vsub.s32 5, %v182
    %v184 = vrot.slane %v76, %v183
    %v185 = vmul.f32 %v175, %v184
    %v186 = vmul.f32 %v179, %v184
    %v187 = vadd.f32 %v171, %v185
    %v188 = vadd.f32 %v172, %v186
    %189 = vset.pattern.permute.xlu0 6
    %190 = vperm.xlu0 %189, %v77
    %v191 = vpop.permute.xlu0 %190
    %193 = vset.pattern.permute.xlu0 6
    %194 = vperm.xlu0 %193, %v78
    %v195 = vpop.permute.xlu0 %194
    %v197 = vlaneseq
    %v198 = vshrl.u32 %v197, 7
    %v199 = vsub.s32 6, %v198
    %v200 = vrot.slane %v76, %v199
    %v201 = vmul.f32 %v191, %v200
    %v202 = vmul.f32 %v195, %v200
    %v203 = vadd.f32 %v187, %v201
    %v204 = vadd.f32 %v188, %v202
    %205 = vset.pattern.permute.xlu0 7
    %206 = vperm.xlu0 %205, %v77
    %v207 = vpop.permute.xlu0 %206
    %209 = vset.pattern.permute.xlu0 7
    %210 = vperm.xlu0 %209, %v78
    %v211 = vpop.permute.xlu0 %210
    %v213 = vlaneseq
    %v214 = vshrl.u32 %v213, 7
    %v215 = vsub.s32 7, %v214
    %v216 = vrot.slane %v76, %v215
    %v217 = vmul.f32 %v207, %v216
    %v218 = vmul.f32 %v211, %v216
    %v219 = vadd.f32 %v203, %v217
    %v220 = vadd.f32 %v204, %v218
    %v221 = vmax.f32 %v219, 0.0
    %v222 = vmax.f32 %v220, 0.0
    %v223 = vld [vmem:[%s5] sm:$0x7]
    %v224 = vld [vmem:[%s6] sm:$0x7]
    %226 = vset.pattern.permute.xlu0 0
    %227 = vperm.xlu0 %226, %v223
    %v228 = vpop.permute.xlu0 %227
    %v230 = vlaneseq
    %v231 = vshrl.u32 %v230, 7
    %v232 = vsub.s32 0, %v231
    %v233 = vrot.slane %v221, %v232
    %v234 = vmul.f32 %v228, %v233
    %236 = vset.pattern.permute.xlu0 0
    %237 = vperm.xlu0 %236, %v224
    %v238 = vpop.permute.xlu0 %237
    %v240 = vadd.f32 %v238, %v234
    %241 = vset.pattern.permute.xlu0 1
    %242 = vperm.xlu0 %241, %v223
    %v243 = vpop.permute.xlu0 %242
    %v245 = vlaneseq
    %v246 = vshrl.u32 %v245, 7
    %v247 = vsub.s32 1, %v246
    %v248 = vrot.slane %v221, %v247
    %v249 = vmul.f32 %v243, %v248
    %v250 = vadd.f32 %v240, %v249
    %251 = vset.pattern.permute.xlu0 2
    %252 = vperm.xlu0 %251, %v223
    %v253 = vpop.permute.xlu0 %252
    %v255 = vlaneseq
    %v256 = vshrl.u32 %v255, 7
    %v257 = vsub.s32 2, %v256
    %v258 = vrot.slane %v221, %v257
    %v259 = vmul.f32 %v253, %v258
    %v260 = vadd.f32 %v250, %v259
    %261 = vset.pattern.permute.xlu0 3
    %262 = vperm.xlu0 %261, %v223
    %v263 = vpop.permute.xlu0 %262
    %v265 = vlaneseq
    %v266 = vshrl.u32 %v265, 7
    %v267 = vsub.s32 3, %v266
    %v268 = vrot.slane %v221, %v267
    %v269 = vmul.f32 %v263, %v268
    %v270 = vadd.f32 %v260, %v269
    %271 = vset.pattern.permute.xlu0 4
    %272 = vperm.xlu0 %271, %v223
    %v273 = vpop.permute.xlu0 %272
    %v275 = vlaneseq
    %v276 = vshrl.u32 %v275, 7
    %v277 = vsub.s32 4, %v276
    %v278 = vrot.slane %v221, %v277
    %v279 = vmul.f32 %v273, %v278
    %v280 = vadd.f32 %v270, %v279
    %281 = vset.pattern.permute.xlu0 5
    %282 = vperm.xlu0 %281, %v223
    %v283 = vpop.permute.xlu0 %282
    %v285 = vlaneseq
    %v286 = vshrl.u32 %v285, 7
    %v287 = vsub.s32 5, %v286
    %v288 = vrot.slane %v221, %v287
    %v289 = vmul.f32 %v283, %v288
    %v290 = vadd.f32 %v280, %v289
    %291 = vset.pattern.permute.xlu0 6
    %292 = vperm.xlu0 %291, %v223
    %v293 = vpop.permute.xlu0 %292
    %v295 = vlaneseq
    %v296 = vshrl.u32 %v295, 7
    %v297 = vsub.s32 6, %v296
    %v298 = vrot.slane %v221, %v297
    %v299 = vmul.f32 %v293, %v298
    %v300 = vadd.f32 %v290, %v299
    %301 = vset.pattern.permute.xlu0 7
    %302 = vperm.xlu0 %301, %v223
    %v303 = vpop.permute.xlu0 %302
    %v305 = vlaneseq
    %v306 = vshrl.u32 %v305, 7
    %v307 = vsub.s32 7, %v306
    %v308 = vrot.slane %v221, %v307
    %v309 = vmul.f32 %v303, %v308
    %v310 = vadd.f32 %v300, %v309
    %311 = vset.pattern.permute.xlu0 8
    %312 = vperm.xlu0 %311, %v223
    %v313 = vpop.permute.xlu0 %312
    %v315 = vlaneseq
    %v316 = vshrl.u32 %v315, 7
    %v317 = vsub.s32 0, %v316
    %v318 = vrot.slane %v222, %v317
    %v319 = vmul.f32 %v313, %v318
    %v320 = vadd.f32 %v310, %v319
    %321 = vst [vmem:[#allocation2] sm:$0x7] %v320
    // Predicated region
    $region30: #{tpu_custom_call.1} parent=1 // pred_check
      _
    $region31: #{tpu_custom_call.1} parent=1 // pred_check_branch
      %323 = sbr.rel (0) target = $region33
    $region32: #{tpu_custom_call.1} parent=1 // pred_region
      %s325 = ssub.s32 64, 64
      %326 = vsyncadd [#allocation3], %s325
      %s328 = sshll.u32 [#allocation2], 4
      %s329 = int_to_ptr.vmem [resolvable:$true] %s328
      %331 = dma.vmem_to_hbm [thread:$0]  %s329, 64, %s7, [#allocation3]
    $region33: #{tpu_custom_call.1} parent=1 // pred_fallthru
      _
    // Predicated region
    $region34: #{tpu_custom_call.1} parent=1 // pred_check
      _
    $region35: #{tpu_custom_call.1} parent=1 // pred_check_branch
      %333 = sbr.rel (0) target = $region37
    $region36: #{tpu_custom_call.1} parent=1 // pred_region
      %334 = dma.done [#allocation3], 64
    $region37: #{tpu_custom_call.1} parent=1 // pred_fallthru
      _
    %335 = vsyncpa [#allocation3], 1

</llo_original>
